<compile_context>
chip_gen: v6e
topology: v6e:2x2x1
jax: 0.10.0
libtpu: 0.0.40
codegen_flags: <defaults>
</compile_context>

<pallas_src>
import functools

import jax
import jax.numpy as jnp
from jax.experimental import pallas as pl
from jax.experimental.pallas import tpu as pltpu


def _round_up(x: int, m: int) -> int:
    return (x + m - 1) // m * m


# --------------------------------------------------------------------------
# Pallas kernel: fused MLP forward on one batch tile.
#   z_ref : (TB, P)            bf16  activation tile
#   w_ref : (n_layers, P, P)   bf16  padded weights (resident across grid)
#   b_ref : (n_layers, 1, P)   f32   padded biases  (resident across grid)
#   o_ref : (TB, P)            lane-dense output tile
# --------------------------------------------------------------------------
def _make_mlp_kernel(n_layers: int, negative_slope: float = 0.01):
    def kernel(z_ref, w_ref, b_ref, out_ref):
        h = z_ref[...]                                 # bf16 tile, ready for MXU
        for i in range(n_layers):                      # static unroll over layers
            w = w_ref[i]                               # (P, P) bf16
            b = b_ref[i]                               # (1, P) f32
            # bf16 MXU matmul, f32 accumulation; bias add in f32.
            h = jnp.dot(h, w, preferred_element_type=jnp.float32) + b
            if i < n_layers - 1:
                # LeakyReLU (PyTorch default negative_slope=0.01), f32 VPU path.
                h = jnp.where(h >= 0, h, negative_slope * h)
                # TODO(synk): nn.Dropout(0.4) is identity in eval mode; training
                # dropout (stateful RNG masking) intentionally not applied.
                h = h.astype(jnp.bfloat16)             # feed next MXU layer as bf16
        out_ref[...] = h.astype(out_ref.dtype)

    return kernel


# --------------------------------------------------------------------------
# One-time parameter packing (do this at model-load time, NOT per call).
# --------------------------------------------------------------------------
def pack_classifier_params(weights_t, biases):
    """Pack per-layer params into two contiguous pre-padded buffers.

    weights_t: list of (in_dim, out_dim) f32 spectral-normalized weights
               (already transposed from PyTorch's (out, in) layout)
    biases:    list of (out_dim,) f32
    Returns (w_packed bf16 (L,P,P), b_packed f32 (L,1,P), out_dim, P).
    """
    n_layers = len(weights_t)
    dims = [weights_t[0].shape[0]] + [w.shape[1] for w in weights_t]
    out_dim = dims[-1]
    P = max(_round_up(d, 128) for d in dims)

    w_packed = jnp.zeros((n_layers, P, P), jnp.bfloat16)
    b_packed = jnp.zeros((n_layers, 1, P), jnp.float32)
    for i, (w, b) in enumerate(zip(weights_t, biases)):
        w_packed = w_packed.at[i, : w.shape[0], : w.shape[1]].set(
            w.astype(jnp.bfloat16))
        b_flat = jnp.asarray(b, jnp.float32).reshape(-1)
        b_packed = b_packed.at[i, 0, : b_flat.shape[0]].set(b_flat)
    return w_packed, b_packed, out_dim, P


def _choose_batch_tile(B8: int, tb_max: int) -> int:
    """Multiple-of-8 batch tile; >=2 grid steps once B8 >= 16 (v7x megacore)."""
    if B8 <= 8:
        return 8
    half = _round_up((B8 + 1) // 2, 8)
    return max(8, min(tb_max, half))


# --------------------------------------------------------------------------
# Jitted forward: pad batch, launch gridded pallas_call, un-pad (slice fuses
# into this jit / the consumer's jit).
# --------------------------------------------------------------------------
@functools.partial(jax.jit, static_argnames=("out_dim", "tb_max", "out_dtype"))
def classifier_forward(z, w_packed, b_packed, *, out_dim,
                       tb_max: int = 1024, out_dtype=jnp.float32):
    """z: (B, latent_dim) f32/bf16.  Params from pack_classifier_params."""
    n_layers, P, _ = w_packed.shape
    B, latent_dim = z.shape

    # ---- Pad batch, cast activations to bf16 (halves input DMA bytes) ------
    B8 = _round_up(B, 8)
    TB = _choose_batch_tile(B8, tb_max)
    B_pad = _round_up(B8, TB)
    z_pad = jnp.zeros((B_pad, P), jnp.bfloat16)
    z_pad = z_pad.at[:B, :latent_dim].set(z.astype(jnp.bfloat16))

    grid = (B_pad // TB,)

    flops = 2 * B_pad * n_layers * P * P
    bytes_accessed = int(z_pad.size * 2 + w_packed.size * 2
                         + b_packed.size * 4
                         + B_pad * P * jnp.dtype(out_dtype).itemsize)

    out_pad = pl.pallas_call(
        _make_mlp_kernel(n_layers),
        out_shape=jax.ShapeDtypeStruct((B_pad, P), out_dtype),
        grid=grid,
        in_specs=[
            pl.BlockSpec((TB, P), lambda i: (i, 0)),              # activation tile
            pl.BlockSpec((n_layers, P, P), lambda i: (0, 0, 0)),  # weights resident
            pl.BlockSpec((n_layers, 1, P), lambda i: (0, 0, 0)),  # biases resident
        ],
        out_specs=pl.BlockSpec((TB, P), lambda i: (i, 0)),
        compiler_params=pltpu.CompilerParams(
            # Batch axis is embarrassingly parallel -> shards across v7x's 2 TCs
            # (grid has >=2 steps once B_pad >= 16).
            dimension_semantics=("parallel",),
            # VMEM budget note: weights cost n_layers*P*P*2 bytes and are
            # double-buffered even with a constant index_map (~192 KiB today).
            # If layer widths grow, re-check against v7x's 64 MiB (32 MiB default
            # scoped) and set vmem_limit_bytes / pipeline_mode=pl.Buffered(1)
            # on the weight BlockSpec.
        ),
        cost_estimate=pl.CostEstimate(
            flops=flops, transcendentals=0, bytes_accessed=bytes_accessed),
    )(z_pad, w_packed, b_packed)

    # Drop batch / lane padding (fuses into this jit / the consumer).
    return out_pad[:B, :out_dim]


# --------------------------------------------------------------------------
# Parameter setup (plain JAX glue): deterministic init + spectral normalization
# --------------------------------------------------------------------------
def spectral_normalize(w, key, n_power_iterations: int = 10, eps: float = 1e-12):
    """Return w / sigma_max(w); w in PyTorch layout (out_features, in_features).

    Note: PyTorch's spectral_norm runs 1 power iteration per training forward
    with persistent u/v; here we do 10 iterations once at init (init glue)."""
    u = jax.random.normal(key, (w.shape[0],), dtype=w.dtype)
    u = u / (jnp.linalg.norm(u) + eps)
    v = None
    for _ in range(n_power_iterations):
        v = w.T @ u
        v = v / (jnp.linalg.norm(v) + eps)
        u = w @ v
        u = u / (jnp.linalg.norm(u) + eps)
    sigma = u @ (w @ v)
    return w / sigma


def init_classifier_params(key, latent_dim, layer_dims):
    """Deterministically init spectral-normalized Linear params."""
    weights_t, biases = [], []
    in_dim = latent_dim
    for out_dim in layer_dims:
        key, kw, kb, ku = jax.random.split(key, 4)
        bound = 1.0 / jnp.sqrt(in_dim)
        w = jax.random.uniform(kw, (out_dim, in_dim), jnp.float32, -bound, bound)
        b = jax.random.uniform(kb, (out_dim,), jnp.float32, -bound, bound)
        w_sn = spectral_normalize(w, ku)
        weights_t.append(jnp.asarray(w_sn.T))          # (in_dim, out_dim)
        biases.append(jnp.asarray(b))
        in_dim = out_dim
    return weights_t, biases


# --------------------------------------------------------------------------
# Pure-JAX references
# --------------------------------------------------------------------------
def classifier_ref_bf16(z, weights_t, biases, negative_slope=0.01):
    """Mirrors the kernel's bf16-matmul / f32-accumulate numerics."""
    h = z.astype(jnp.bfloat16)
    n_layers = len(weights_t)
    for i, (w, b) in enumerate(zip(weights_t, biases)):
        h = jnp.dot(h, w.astype(jnp.bfloat16),
                    preferred_element_type=jnp.float32) + b.reshape(1, -1)
        if i < n_layers - 1:
            h = jnp.where(h >= 0, h, negative_slope * h)
            h = h.astype(jnp.bfloat16)
    return h.astype(jnp.float32)


def classifier_ref_f32(z, weights_t, biases, negative_slope=0.01):
    h = z
    n_layers = len(weights_t)
    for i, (w, b) in enumerate(zip(weights_t, biases)):
        h = h @ w + b.reshape(1, -1)
        if i < n_layers - 1:
            h = jnp.where(h >= 0, h, negative_slope * h)
    return h


if __name__ == "__main__":
    # Config analogous to:
    #   config.model_opts['classifier']['latent_dim']      = 32
    #   config.model_opts['classifier']['dec_layer_dims']  = [64, 64, 16]
    latent_dim = 32
    dec_layer_dims = [64, 64, 16]
    batch = 8

    key = jax.random.PRNGKey(0)
    key, kz, kp = jax.random.split(key, 3)

    z = jax.random.normal(kz, (batch, latent_dim), dtype=jnp.float32)
    weights_t, biases = init_classifier_params(kp, latent_dim, dec_layer_dims)

    # One-time packing (load time), then the jitted per-call forward.
    w_packed, b_packed, out_dim, P = pack_classifier_params(weights_t, biases)

    out = classifier_forward(z, w_packed, b_packed, out_dim=out_dim)
    out = jax.block_until_ready(out)

    assert out.shape == (batch, dec_layer_dims[-1])

    ref_q = classifier_ref_bf16(z, weights_t, biases)   # same bf16 numerics
    ref_f = classifier_ref_f32(z, weights_t, biases)    # full-precision semantics
    assert jnp.allclose(out, ref_q, atol=1e-3, rtol=1e-3), "mismatch vs bf16 reference"
    # NOTE: bf16 weight/activation quantization is a deliberate precision choice
    # vs. PyTorch's f32 spectral-normalized weights; looser tolerance vs f32 ref.
    assert jnp.allclose(out, ref_f, atol=5e-2, rtol=5e-2), "mismatch vs f32 reference"

    # Second call exercises the cached jit path (no re-packing, no re-trace).
    out2 = jax.block_until_ready(
        classifier_forward(z, w_packed, b_packed, out_dim=out_dim))
    assert jnp.allclose(out, out2)

    print("KERNEL_OK")
</pallas_src>

<mosaic_0001>
module attributes {stable_mosaic.version = 11 : i64} {
  func.func @kernel(%arg0: i32, %arg1: memref<8x128xbf16, #tpu.memory_space<vmem>>, %arg2: memref<3x128x128xbf16, #tpu.memory_space<vmem>>, %arg3: memref<3x1x128xf32, #tpu.memory_space<vmem>>, %arg4: memref<8x128xf32, #tpu.memory_space<vmem>>) attributes {dimension_semantics = [#tpu.dimension_semantics<parallel>], iteration_bounds = array<i64: 1>, scalar_prefetch = 0 : i64, scratch_operands = 0 : i64, tpu.core_type = #tpu.core_type<tc>, window_params = [{transform_indices = @transform_0, window_bounds = array<i64: 8, 128>}, {pipeline_mode = #tpu.pipeline_mode<synchronous>, transform_indices = @transform_1, window_bounds = array<i64: 3, 128, 128>}, {pipeline_mode = #tpu.pipeline_mode<synchronous>, transform_indices = @transform_2, window_bounds = array<i64: 3, 1, 128>}, {transform_indices = @transform_3, window_bounds = array<i64: 8, 128>}]} {
    %c0 = arith.constant 0 : index
    %c0_0 = arith.constant 0 : index
    %0 = vector.load %arg1[%c0, %c0_0] : memref<8x128xbf16, #tpu.memory_space<vmem>>, vector<8x128xbf16>
    %c0_1 = arith.constant 0 : index
    %c0_2 = arith.constant 0 : index
    %c0_3 = arith.constant 0 : index
    %1 = vector.load %arg2[%c0_1, %c0_2, %c0_3] : memref<3x128x128xbf16, #tpu.memory_space<vmem>>, vector<1x128x128xbf16>
    %2 = vector.shape_cast %1 : vector<1x128x128xbf16> to vector<128x128xbf16>
    %c0_4 = arith.constant 0 : index
    %c0_5 = arith.constant 0 : index
    %c0_6 = arith.constant 0 : index
    %3 = vector.load %arg3[%c0_4, %c0_5, %c0_6] : memref<3x1x128xf32, #tpu.memory_space<vmem>>, vector<1x1x128xf32>
    %4 = vector.shape_cast %3 : vector<1x1x128xf32> to vector<1x128xf32>
    %cst = arith.constant dense<0.000000e+00> : vector<8x128xf32>
    %5 = tpu.matmul %0, %2, %cst {dimension_numbers = #tpu.dot_dimension_numbers<[1], [0], [0], [1], [0, 0, 1, 1], [], []>} : vector<8x128xbf16>, vector<128x128xbf16>, vector<8x128xf32> -> vector<8x128xf32>
    %6 = vector.broadcast %4 : vector<1x128xf32> to vector<8x128xf32>
    %7 = arith.addf %5, %6 : vector<8x128xf32>
    %cst_7 = arith.constant 0.000000e+00 : f32
    %8 = vector.broadcast %cst_7 : f32 to vector<8x128xf32>
    %9 = arith.cmpf oge, %7, %8 : vector<8x128xf32>
    %cst_8 = arith.constant 0.00999999977 : f32
    %10 = vector.broadcast %cst_8 : f32 to vector<8x128xf32>
    %11 = arith.mulf %10, %7 : vector<8x128xf32>
    %12 = arith.select %9, %7, %11 : vector<8x128xi1>, vector<8x128xf32>
    %13 = arith.truncf %12 : vector<8x128xf32> to vector<8x128xbf16>
    %c1 = arith.constant 1 : index
    %c0_9 = arith.constant 0 : index
    %c0_10 = arith.constant 0 : index
    %14 = vector.load %arg2[%c1, %c0_9, %c0_10] : memref<3x128x128xbf16, #tpu.memory_space<vmem>>, vector<1x128x128xbf16>
    %15 = vector.shape_cast %14 : vector<1x128x128xbf16> to vector<128x128xbf16>
    %c1_11 = arith.constant 1 : index
    %c0_12 = arith.constant 0 : index
    %c0_13 = arith.constant 0 : index
    %16 = vector.load %arg3[%c1_11, %c0_12, %c0_13] : memref<3x1x128xf32, #tpu.memory_space<vmem>>, vector<1x1x128xf32>
    %17 = vector.shape_cast %16 : vector<1x1x128xf32> to vector<1x128xf32>
    %cst_14 = arith.constant dense<0.000000e+00> : vector<8x128xf32>
    %18 = tpu.matmul %13, %15, %cst_14 {dimension_numbers = #tpu.dot_dimension_numbers<[1], [0], [0], [1], [0, 0, 1, 1], [], []>} : vector<8x128xbf16>, vector<128x128xbf16>, vector<8x128xf32> -> vector<8x128xf32>
    %19 = vector.broadcast %17 : vector<1x128xf32> to vector<8x128xf32>
    %20 = arith.addf %18, %19 : vector<8x128xf32>
    %cst_15 = arith.constant 0.000000e+00 : f32
    %21 = vector.broadcast %cst_15 : f32 to vector<8x128xf32>
    %22 = arith.cmpf oge, %20, %21 : vector<8x128xf32>
    %cst_16 = arith.constant 0.00999999977 : f32
    %23 = vector.broadcast %cst_16 : f32 to vector<8x128xf32>
    %24 = arith.mulf %23, %20 : vector<8x128xf32>
    %25 = arith.select %22, %20, %24 : vector<8x128xi1>, vector<8x128xf32>
    %26 = arith.truncf %25 : vector<8x128xf32> to vector<8x128xbf16>
    %c2 = arith.constant 2 : index
    %c0_17 = arith.constant 0 : index
    %c0_18 = arith.constant 0 : index
    %27 = vector.load %arg2[%c2, %c0_17, %c0_18] : memref<3x128x128xbf16, #tpu.memory_space<vmem>>, vector<1x128x128xbf16>
    %28 = vector.shape_cast %27 : vector<1x128x128xbf16> to vector<128x128xbf16>
    %c2_19 = arith.constant 2 : index
    %c0_20 = arith.constant 0 : index
    %c0_21 = arith.constant 0 : index
    %29 = vector.load %arg3[%c2_19, %c0_20, %c0_21] : memref<3x1x128xf32, #tpu.memory_space<vmem>>, vector<1x1x128xf32>
    %30 = vector.shape_cast %29 : vector<1x1x128xf32> to vector<1x128xf32>
    %cst_22 = arith.constant dense<0.000000e+00> : vector<8x128xf32>
    %31 = tpu.matmul %26, %28, %cst_22 {dimension_numbers = #tpu.dot_dimension_numbers<[1], [0], [0], [1], [0, 0, 1, 1], [], []>} : vector<8x128xbf16>, vector<128x128xbf16>, vector<8x128xf32> -> vector<8x128xf32>
    %32 = vector.broadcast %30 : vector<1x128xf32> to vector<8x128xf32>
    %33 = arith.addf %31, %32 : vector<8x128xf32>
    %c0_23 = arith.constant 0 : index
    %c0_24 = arith.constant 0 : index
    %34 = vector.load %arg4[%c0_23, %c0_24] : memref<8x128xf32, #tpu.memory_space<vmem>>, vector<8x128xf32>
    tpu.vector_store %arg4[%c0_23, %c0_24], %33 {strides = array<i32>} : memref<8x128xf32, #tpu.memory_space<vmem>>, vector<8x128xf32>,
    return
  }
  func.func @transform_0(%arg0: i32) -> (i32, i32) {
    %c0_i32 = arith.constant 0 : i32
    %c0_i32_0 = arith.constant 0 : i32
    return %arg0, %c0_i32 : i32, i32
  }
  func.func @transform_1(%arg0: i32) -> (i32, i32, i32) {
    %c0_i32 = arith.constant 0 : i32
    %c0_i32_0 = arith.constant 0 : i32
    %c0_i32_1 = arith.constant 0 : i32
    %c0_i32_2 = arith.constant 0 : i32
    return %c0_i32, %c0_i32_0, %c0_i32_1 : i32, i32, i32
  }
  func.func @transform_2(%arg0: i32) -> (i32, i32, i32) {
    %c0_i32 = arith.constant 0 : i32
    %c0_i32_0 = arith.constant 0 : i32
    %c0_i32_1 = arith.constant 0 : i32
    %c0_i32_2 = arith.constant 0 : i32
    return %c0_i32, %c0_i32_0, %c0_i32_1 : i32, i32, i32
  }
  func.func @transform_3(%arg0: i32) -> (i32, i32) {
    %c0_i32 = arith.constant 0 : i32
    %c0_i32_0 = arith.constant 0 : i32
    return %arg0, %c0_i32 : i32, i32
  }
}

</mosaic_0001>

<llo_original>
// kernel: classifier_forward.1
$region0: #{classifier_forward.1}
  #allocation0 [shape = 'u32[]', space=smem, size = 0x4, offset = 0x4, fixed_abs, tag = 'smem constant byte address 0x4 - core index']
  #allocation1 [shape = 'u32[144,128]{1,0:T(1,128)}', space=vmem, size = 0x12000, scoped, tag = 'internal scratch']
  %s0 = inlined_call_operand.vmem [shape: bf16[8,128], index: 0, kind: input, shape index: {}]
  %s1 = inlined_call_operand.hbm [shape: bf16[3,128,128], index: 1, kind: input, shape index: {}]
  %s2 = inlined_call_operand.vmem [shape: f32[3,1,128], index: 2, kind: input, shape index: {}]
  %s3 = inlined_call_operand.hbm [shape: f32[8,128], index: 3, kind: output, shape index: {}]
  %s4 = sld [smem:[#allocation0]]
  $region26: #{classifier_forward.1} parent=0
    _
  %s6 = ssub.s32 1, %s4
  %s7 = scalar_select 0, %s6, %s4
  $region1: #{classifier_forward.1} parent=0
    #allocation2 [shape = 'u8[98304]{0}', space=vmem, size = 0x18000, scoped, tag = 'input window, operand 1, single buffered']
    #allocation3 [shape = 's32[1]{0}', space=sflag, size = 0x4, scoped, tag = 'scoped memory for classifier_forward.1']
    #allocation4 [shape = 's32[1]{0}', space=sflag, size = 0x4, scoped, tag = 'scoped memory for classifier_forward.1']
    #allocation5 [shape = 'u8[4096]{0}', space=vmem, size = 0x1000, scoped, tag = 'output window, operand 0, single buffered']
    %8 = vsyncpa [#allocation3], 0
    %9 = vsyncpa [#allocation4], 0
    // Predicated region
    $region2: #{classifier_forward.1} parent=1 // pred_check
      _
    $region3: #{classifier_forward.1} parent=1 // pred_check_branch
      %11 = sbr.rel (0) target = $region5
    $region4: #{classifier_forward.1} parent=1 // pred_region
      _
    $region5: #{classifier_forward.1} parent=1 // pred_fallthru
      _
    // Predicated region
    $region6: #{classifier_forward.1} parent=1 // pred_check
      _
    $region7: #{classifier_forward.1} parent=1 // pred_check_branch
      %13 = sbr.rel (0) target = $region9
    $region8: #{classifier_forward.1} parent=1 // pred_region
      %s15 = ssub.s32 3072, 3072
      %16 = vsyncadd [#allocation3], %s15
      %s17 = sshll.u32 [#allocation2], 4
      %s18 = int_to_ptr.vmem [resolvable:$true] %s17
      %23 = dma.hbm_to_vmem [thread:$0]  %s1, 3072, %s18, [#allocation3], 64, 64, 4
    $region9: #{classifier_forward.1} parent=1 // pred_fallthru
      _
    // Predicated region
    $region10: #{classifier_forward.1} parent=1 // pred_check
      _
    $region11: #{classifier_forward.1} parent=1 // pred_check_branch
      %25 = sbr.rel (0) target = $region13
    $region12: #{classifier_forward.1} parent=1 // pred_region
      _
    $region13: #{classifier_forward.1} parent=1 // pred_fallthru
      _
    // Predicated region
    $region14: #{classifier_forward.1} parent=1 // pred_check
      _
    $region15: #{classifier_forward.1} parent=1 // pred_check_branch
      %27 = sbr.rel (0) target = $region17
    $region16: #{classifier_forward.1} parent=1 // pred_region
      %28 = dma.done [#allocation3], 3072
    $region17: #{classifier_forward.1} parent=1 // pred_fallthru
      _
    %v30 = vld [vmem:[%s0] sm:$0xf]
    %v31 = vld [vmem:[#allocation2] sm:$0xf]
    %v32 = vld [vmem:[#allocation2 + $0x4] sm:$0xf]
    %v33 = vld [vmem:[#allocation2 + $0x8] sm:$0xf]
    %v34 = vld [vmem:[#allocation2 + $0xc] sm:$0xf]
    %v35 = vld [vmem:[#allocation2 + $0x10] sm:$0xf]
    %v36 = vld [vmem:[#allocation2 + $0x14] sm:$0xf]
    %v37 = vld [vmem:[#allocation2 + $0x18] sm:$0xf]
    %v38 = vld [vmem:[#allocation2 + $0x1c] sm:$0xf]
    %v39 = vld [vmem:[#allocation2 + $0x20] sm:$0xf]
    %v40 = vld [vmem:[#allocation2 + $0x24] sm:$0xf]
    %v41 = vld [vmem:[#allocation2 + $0x28] sm:$0xf]
    %v42 = vld [vmem:[#allocation2 + $0x2c] sm:$0xf]
    %v43 = vld [vmem:[#allocation2 + $0x30] sm:$0xf]
    %v44 = vld [vmem:[#allocation2 + $0x34] sm:$0xf]
    %v45 = vld [vmem:[#allocation2 + $0x38] sm:$0xf]
    %v46 = vld [vmem:[#allocation2 + $0x3c] sm:$0xf]
    %v47 = vld [vmem:[%s2] sm:$0x1]
    %v49 = vlaneseq
    %v50 = vshrl.u32 %v49, 7
    %v51 = vsub.s32 0, %v50
    %v52 = vrot.slane %v47, %v51
    %v70 = vunpack.c.l.b16 %v31
    %v71 = vunpack.c.l.b16 %v32
    %v72 = vunpack.c.l.b16 %v33
    %v73 = vunpack.c.l.b16 %v34
    %v74 = vunpack.c.l.b16 %v35
    %v75 = vunpack.c.l.b16 %v36
    %v76 = vunpack.c.l.b16 %v37
    %v77 = vunpack.c.l.b16 %v38
    %v78 = vunpack.c.l.b16 %v39
    %v79 = vunpack.c.l.b16 %v40
    %v80 = vunpack.c.l.b16 %v41
    %v81 = vunpack.c.l.b16 %v42
    %v82 = vunpack.c.l.b16 %v43
    %v83 = vunpack.c.l.b16 %v44
    %v84 = vunpack.c.l.b16 %v45
    %v85 = vunpack.c.l.b16 %v46
    %v86 = vpack.c.b16 %v71, %v70
    %v87 = vpack.c.b16 %v73, %v72
    %v88 = vpack.c.b16 %v75, %v74
    %v89 = vpack.c.b16 %v77, %v76
    %v90 = vpack.c.b16 %v79, %v78
    %v91 = vpack.c.b16 %v81, %v80
    %v92 = vpack.c.b16 %v83, %v82
    %v93 = vpack.c.b16 %v85, %v84
    %102 = vmatprep.subr.bf16.mxu0 0
    %103 = vmatpush1.bf16.msra.mxu0 %v93
    %104 = vmatprep.subr.bf16.mxu0 0
    %105 = vmatpush1.bf16.msra.mxu0 %v92
    %106 = vmatprep.subr.bf16.mxu0 0
    %107 = vmatpush1.bf16.msra.mxu0 %v91
    %108 = vmatprep.subr.bf16.mxu0 0
    %109 = vmatpush1.bf16.msra.mxu0 %v90
    %110 = vmatprep.subr.bf16.mxu0 0
    %111 = vmatpush1.bf16.msra.mxu0 %v89
    %112 = vmatprep.subr.bf16.mxu0 0
    %113 = vmatpush1.bf16.msra.mxu0 %v88
    %114 = vmatprep.subr.bf16.mxu0 0
    %115 = vmatpush1.bf16.msra.mxu0 %v87
    %116 = vmatprep.subr.bf16.mxu0 0
    %117 = vmatpush1.bf16.msra.mxu0 %v86
    %118 = vmatprep.subr.bf16.mxu0 0
    %119 = vmatpush2.bf16.msra.mxu0 0
    %120 = vmatprep.subr.bf16.mxu0 0
    %121 = vmatpush2.bf16.msra.mxu0 0
    %122 = vmatprep.subr.bf16.mxu0 0
    %123 = vmatpush2.bf16.msra.mxu0 0
    %124 = vmatprep.subr.bf16.mxu0 0
    %125 = vmatpush2.bf16.msra.mxu0 0
    %126 = vmatprep.subr.bf16.mxu0 0
    %127 = vmatpush2.bf16.msra.mxu0 0
    %128 = vmatprep.subr.bf16.mxu0 0
    %129 = vmatpush2.bf16.msra.mxu0 0
    %130 = vmatprep.subr.bf16.mxu0 0
    %131 = vmatpush2.bf16.msra.mxu0 0
    %132 = vmatprep.subr.bf16.mxu0 0
    %133 = vmatpush2.bf16.msra.mxu0 0
    %134 = vmatprep.mubr.bf16.mxu0 0
    %135 = vmatmul.mubr.bf16.gmra.mxu0 %v30
    %v136 = vpop.f32.mrf.mxu0
    %v137 = vadd.f32 %v52, %v136
    %v138 = vpop.f32.mrf.mxu0
    %v139 = vpop.f32.mrf.mxu0
    %v140 = vpop.f32.mrf.mxu0
    %141 = vdwg.mxu0
    %vm142 = vcmp.ge.f32.partialorder %v137, 0.0
    %v143 = vmul.f32 %v137, 0.01
    %v144 = vsel %vm142, %v137, %v143
    %v145 = vpack.c.bf16 %v144, %v144
    %s146 = scalar_lea.vmem [#allocation2], 64
    %v147 = vld [vmem:[%s146] sm:$0xf]
    %v148 = vld [vmem:[%s146 + $0x4] sm:$0xf]
    %v149 = vld [vmem:[%s146 + $0x8] sm:$0xf]
    %v150 = vld [vmem:[%s146 + $0xc] sm:$0xf]
    %v151 = vld [vmem:[%s146 + $0x10] sm:$0xf]
    %v152 = vld [vmem:[%s146 + $0x14] sm:$0xf]
    %v153 = vld [vmem:[%s146 + $0x18] sm:$0xf]
    %v154 = vld [vmem:[%s146 + $0x1c] sm:$0xf]
    %v155 = vld [vmem:[%s146 + $0x20] sm:$0xf]
    %v156 = vld [vmem:[%s146 + $0x24] sm:$0xf]
    %v157 = vld [vmem:[%s146 + $0x28] sm:$0xf]
    %v158 = vld [vmem:[%s146 + $0x2c] sm:$0xf]
    %v159 = vld [vmem:[%s146 + $0x30] sm:$0xf]
    %v160 = vld [vmem:[%s146 + $0x34] sm:$0xf]
    %v161 = vld [vmem:[%s146 + $0x38] sm:$0xf]
    %v162 = vld [vmem:[%s146 + $0x3c] sm:$0xf]
    %s163 = scalar_lea.vmem %s2, 1
    %v164 = vld [vmem:[%s163] sm:$0x1]
    %v166 = vlaneseq
    %v167 = vshrl.u32 %v166, 7
    %v168 = vsub.s32 0, %v167
    %v169 = vrot.slane %v164, %v168
    %v187 = vunpack.c.l.b16 %v147
    %v188 = vunpack.c.l.b16 %v148
    %v189 = vunpack.c.l.b16 %v149
    %v190 = vunpack.c.l.b16 %v150
    %v191 = vunpack.c.l.b16 %v151
    %v192 = vunpack.c.l.b16 %v152
    %v193 = vunpack.c.l.b16 %v153
    %v194 = vunpack.c.l.b16 %v154
    %v195 = vunpack.c.l.b16 %v155
    %v196 = vunpack.c.l.b16 %v156
    %v197 = vunpack.c.l.b16 %v157
    %v198 = vunpack.c.l.b16 %v158
    %v199 = vunpack.c.l.b16 %v159
    %v200 = vunpack.c.l.b16 %v160
    %v201 = vunpack.c.l.b16 %v161
    %v202 = vunpack.c.l.b16 %v162
    %v203 = vpack.c.b16 %v188, %v187
    %v204 = vpack.c.b16 %v190, %v189
    %v205 = vpack.c.b16 %v192, %v191
    %v206 = vpack.c.b16 %v194, %v193
    %v207 = vpack.c.b16 %v196, %v195
    %v208 = vpack.c.b16 %v198, %v197
    %v209 = vpack.c.b16 %v200, %v199
    %v210 = vpack.c.b16 %v202, %v201
    %219 = vmatprep.subr.bf16.mxu0 0
    %220 = vmatpush1.bf16.msra.mxu0 %v210
    %221 = vmatprep.subr.bf16.mxu0 0
    %222 = vmatpush1.bf16.msra.mxu0 %v209
    %223 = vmatprep.subr.bf16.mxu0 0
    %224 = vmatpush1.bf16.msra.mxu0 %v208
    %225 = vmatprep.subr.bf16.mxu0 0
    %226 = vmatpush1.bf16.msra.mxu0 %v207
    %227 = vmatprep.subr.bf16.mxu0 0
    %228 = vmatpush1.bf16.msra.mxu0 %v206
    %229 = vmatprep.subr.bf16.mxu0 0
    %230 = vmatpush1.bf16.msra.mxu0 %v205
    %231 = vmatprep.subr.bf16.mxu0 0
    %232 = vmatpush1.bf16.msra.mxu0 %v204
    %233 = vmatprep.subr.bf16.mxu0 0
    %234 = vmatpush1.bf16.msra.mxu0 %v203
    %235 = vmatprep.subr.bf16.mxu0 0
    %236 = vmatpush2.bf16.msra.mxu0 0
    %237 = vmatprep.subr.bf16.mxu0 0
    %238 = vmatpush2.bf16.msra.mxu0 0
    %239 = vmatprep.subr.bf16.mxu0 0
    %240 = vmatpush2.bf16.msra.mxu0 0
    %241 = vmatprep.subr.bf16.mxu0 0
    %242 = vmatpush2.bf16.msra.mxu0 0
    %243 = vmatprep.subr.bf16.mxu0 0
    %244 = vmatpush2.bf16.msra.mxu0 0
    %245 = vmatprep.subr.bf16.mxu0 0
    %246 = vmatpush2.bf16.msra.mxu0 0
    %247 = vmatprep.subr.bf16.mxu0 0
    %248 = vmatpush2.bf16.msra.mxu0 0
    %249 = vmatprep.subr.bf16.mxu0 0
    %250 = vmatpush2.bf16.msra.mxu0 0
    %251 = vmatprep.mubr.bf16.mxu0 0
    %252 = vmatmul.mubr.bf16.gmra.mxu0 %v145
    %v253 = vpop.f32.mrf.mxu0
    %v254 = vadd.f32 %v169, %v253
    %v255 = vpop.f32.mrf.mxu0
    %v256 = vpop.f32.mrf.mxu0
    %v257 = vpop.f32.mrf.mxu0
    %258 = vdwg.mxu0
    %vm259 = vcmp.ge.f32.partialorder %v254, 0.0
    %v260 = vmul.f32 %v254, 0.01
    %v261 = vsel %vm259, %v254, %v260
    %v262 = vpack.c.bf16 %v261, %v261
    %s263 = scalar_lea.vmem [#allocation2], 128
    %v264 = vld [vmem:[%s263] sm:$0xf]
    %v265 = vld [vmem:[%s263 + $0x4] sm:$0xf]
    %v266 = vld [vmem:[%s263 + $0x8] sm:$0xf]
    %v267 = vld [vmem:[%s263 + $0xc] sm:$0xf]
    %v268 = vld [vmem:[%s263 + $0x10] sm:$0xf]
    %v269 = vld [vmem:[%s263 + $0x14] sm:$0xf]
    %v270 = vld [vmem:[%s263 + $0x18] sm:$0xf]
    %v271 = vld [vmem:[%s263 + $0x1c] sm:$0xf]
    %v272 = vld [vmem:[%s263 + $0x20] sm:$0xf]
    %v273 = vld [vmem:[%s263 + $0x24] sm:$0xf]
    %v274 = vld [vmem:[%s263 + $0x28] sm:$0xf]
    %v275 = vld [vmem:[%s263 + $0x2c] sm:$0xf]
    %v276 = vld [vmem:[%s263 + $0x30] sm:$0xf]
    %v277 = vld [vmem:[%s263 + $0x34] sm:$0xf]
    %v278 = vld [vmem:[%s263 + $0x38] sm:$0xf]
    %v279 = vld [vmem:[%s263 + $0x3c] sm:$0xf]
    %s280 = scalar_lea.vmem %s2, 2
    %v281 = vld [vmem:[%s280] sm:$0x1]
    %v283 = vlaneseq
    %v284 = vshrl.u32 %v283, 7
    %v285 = vsub.s32 0, %v284
    %v286 = vrot.slane %v281, %v285
    %v304 = vunpack.c.l.b16 %v264
    %v305 = vunpack.c.l.b16 %v265
    %v306 = vunpack.c.l.b16 %v266
    %v307 = vunpack.c.l.b16 %v267
    %v308 = vunpack.c.l.b16 %v268
    %v309 = vunpack.c.l.b16 %v269
    %v310 = vunpack.c.l.b16 %v270
    %v311 = vunpack.c.l.b16 %v271
    %v312 = vunpack.c.l.b16 %v272
    %v313 = vunpack.c.l.b16 %v273
    %v314 = vunpack.c.l.b16 %v274
    %v315 = vunpack.c.l.b16 %v275
    %v316 = vunpack.c.l.b16 %v276
    %v317 = vunpack.c.l.b16 %v277
    %v318 = vunpack.c.l.b16 %v278
    %v319 = vunpack.c.l.b16 %v279
    %v320 = vpack.c.b16 %v305, %v304
    %v321 = vpack.c.b16 %v307, %v306
    %v322 = vpack.c.b16 %v309, %v308
    %v323 = vpack.c.b16 %v311, %v310
    %v324 = vpack.c.b16 %v313, %v312
    %v325 = vpack.c.b16 %v315, %v314
    %v326 = vpack.c.b16 %v317, %v316
    %v327 = vpack.c.b16 %v319, %v318
    %336 = vmatprep.subr.bf16.mxu0 0
    %337 = vmatpush1.bf16.msra.mxu0 %v327
    %338 = vmatprep.subr.bf16.mxu0 0
    %339 = vmatpush1.bf16.msra.mxu0 %v326
    %340 = vmatprep.subr.bf16.mxu0 0
    %341 = vmatpush1.bf16.msra.mxu0 %v325
    %342 = vmatprep.subr.bf16.mxu0 0
    %343 = vmatpush1.bf16.msra.mxu0 %v324
    %344 = vmatprep.subr.bf16.mxu0 0
    %345 = vmatpush1.bf16.msra.mxu0 %v323
    %346 = vmatprep.subr.bf16.mxu0 0
    %347 = vmatpush1.bf16.msra.mxu0 %v322
    %348 = vmatprep.subr.bf16.mxu0 0
    %349 = vmatpush1.bf16.msra.mxu0 %v321
    %350 = vmatprep.subr.bf16.mxu0 0
    %351 = vmatpush1.bf16.msra.mxu0 %v320
    %352 = vmatprep.subr.bf16.mxu0 0
    %353 = vmatpush2.bf16.msra.mxu0 0
    %354 = vmatprep.subr.bf16.mxu0 0
    %355 = vmatpush2.bf16.msra.mxu0 0
    %356 = vmatprep.subr.bf16.mxu0 0
    %357 = vmatpush2.bf16.msra.mxu0 0
    %358 = vmatprep.subr.bf16.mxu0 0
    %359 = vmatpush2.bf16.msra.mxu0 0
    %360 = vmatprep.subr.bf16.mxu0 0
    %361 = vmatpush2.bf16.msra.mxu0 0
    %362 = vmatprep.subr.bf16.mxu0 0
    %363 = vmatpush2.bf16.msra.mxu0 0
    %364 = vmatprep.subr.bf16.mxu0 0
    %365 = vmatpush2.bf16.msra.mxu0 0
    %366 = vmatprep.subr.bf16.mxu0 0
    %367 = vmatpush2.bf16.msra.mxu0 0
    %368 = vmatprep.mubr.bf16.mxu0 0
    %369 = vmatmul.mubr.bf16.gmra.mxu0 %v262
    %v370 = vpop.f32.mrf.mxu0
    %v371 = vadd.f32 %v286, %v370
    %v372 = vpop.f32.mrf.mxu0
    %v373 = vpop.f32.mrf.mxu0
    %v374 = vpop.f32.mrf.mxu0
    %375 = vdwg.mxu0
    %376 = vst [vmem:[#allocation5] sm:$0xff] %v371
    // Predicated region
    $region18: #{classifier_forward.1} parent=1 // pred_check
      _
    $region19: #{classifier_forward.1} parent=1 // pred_check_branch
      %378 = sbr.rel (0) target = $region21
    $region20: #{classifier_forward.1} parent=1 // pred_region
      %s380 = ssub.s32 128, 128
      %381 = vsyncadd [#allocation4], %s380
      %s383 = sshll.u32 [#allocation5], 4
      %s384 = int_to_ptr.vmem [resolvable:$true] %s383
      %386 = dma.vmem_to_hbm [thread:$0]  %s384, 128, %s3, [#allocation4]
    $region21: #{classifier_forward.1} parent=1 // pred_fallthru
      _
    // Predicated region
    $region22: #{classifier_forward.1} parent=1 // pred_check
      _
    $region23: #{classifier_forward.1} parent=1 // pred_check_branch
      %388 = sbr.rel (0) target = $region25
    $region24: #{classifier_forward.1} parent=1 // pred_region
      %389 = dma.done [#allocation4], 128
    $region25: #{classifier_forward.1} parent=1 // pred_fallthru
      _
    %390 = vsyncpa [#allocation3], 1
    %391 = vsyncpa [#allocation4], 1

</llo_original>
